<compile_context>
chip_gen: v7x
topology: tpu7x:2x2x1
jax: 0.10.0
libtpu: 0.0.40
codegen_flags: <defaults>
</compile_context>

<pallas_src>
import functools
import math

import jax
import jax.numpy as jnp
import numpy as np
from jax import lax
from jax.experimental import pallas as pl
from jax.experimental.pallas import tpu as pltpu


# ---------------------------------------------------------------------------
# Pallas kernel: fused im2col + matmul + bias (one batch element per grid step)
# ---------------------------------------------------------------------------
def _fused_conv_kernel(x_ref, w_ref, b_ref, o_ref, *,
                       KH, KW, sh, sw, Cin, Wph, CH):
    """
    x_ref : (1, sh*sw, Cin, Hph*Wph)  bf16  space-to-depth phase image (resident per step)
    w_ref : (KH*KW, Cout, Cin)        bf16  one (Cout, Cin) tap per (kh, kw)
    b_ref : (Cout, 1)                 f32
    o_ref : (1, Cout, CH)             f32   CH = H_out * Wph  (lane-dense store)
    """
    Cout = w_ref.shape[1]
    acc = jnp.zeros((Cout, CH), dtype=jnp.float32)

    # Fused im2col: each tap (kh, kw) is a STATIC contiguous slice of the flattened
    # phase image (phase index and lane offset are Python ints), contracted against
    # its (Cout, Cin) weight tap on the MXU with f32 accumulation.
    for kh in range(KH):
        for kw in range(KW):
            p = (kh % sh) * sw + (kw % sw)           # which stride phase
            off = (kh // sh) * Wph + (kw // sw)      # static offset in flattened phase space
            xc = x_ref[0, p, :, off:off + CH]        # (Cin, CH) bf16, spatial on lanes
            wt = w_ref[kh * KW + kw]                 # (Cout, Cin) bf16
            acc = acc + jnp.dot(wt, xc, preferred_element_type=jnp.float32)

    o_ref[...] = (acc + b_ref[...])[None].astype(o_ref.dtype)


# ---------------------------------------------------------------------------
# Helpers
# ---------------------------------------------------------------------------
def _apply_pad_or_crop(x, top, bottom, left, right):
    """F.pad semantics on the last two dims: negative amounts crop, positive pad with zeros."""
    N, C, H, W = x.shape
    ct, cb = max(0, -top), max(0, -bottom)
    cl, cr = max(0, -left), max(0, -right)
    if ct or cb or cl or cr:
        x = x[:, :, ct:H - cb, cl:W - cr]
    pt, pb = max(0, top), max(0, bottom)
    plft, prt = max(0, left), max(0, right)
    if pt or pb or plft or prt:
        x = jnp.pad(x, ((0, 0), (0, 0), (pt, pb), (plft, prt)))
    return x


# ---------------------------------------------------------------------------
# Conv2dStaticSamePadding forward (NCHW in / NCHW out)
# ---------------------------------------------------------------------------
def conv2d_static_same_padding(x, weight, bias=None, stride=(1, 1)):
    """
    x      : (N, Cin, H, W)        float32
    weight : (Cout, Cin, KH, KW)   float32  (PyTorch conv weight layout, groups=1)
    bias   : (Cout,) or None       float32
    stride : (sh, sw)
    Returns: (N, Cout, H_out, W_out) with TF 'SAME' padding semantics,
             matching the PyTorch module's forward() (bf16 matmul, f32 accumulation).
    """
    N, Cin, H, W = x.shape
    Cout, Cin_w, KH, KW = weight.shape
    assert Cin_w == Cin, "groups != 1 not supported"
    sh, sw = int(stride[0]), int(stride[1])
    if bias is None:
        bias = jnp.zeros((Cout,), dtype=x.dtype)

    # --- static SAME-padding computation (identical arithmetic to the module)
    extra_h = (math.ceil(W / sw) - 1) * sw - W + KW
    extra_v = (math.ceil(H / sh) - 1) * sh - H + KH
    left = extra_h // 2
    right = extra_h - left
    top = extra_v // 2
    bottom = extra_v - top

    xp = _apply_pad_or_crop(x, top, bottom, left, right)
    Hp, Wp = xp.shape[-2:]
    H_out = (Hp - KH) // sh + 1
    W_out = (Wp - KW) // sw + 1

    # --- align padded image to the stride grid; one extra phase row of zeros so the
    #     contiguous (slightly over-reading) lane slices never run off the buffer.
    Hp2 = int(pl.cdiv(Hp, sh)) * sh + sh
    Wp2 = int(pl.cdiv(Wp, sw)) * sw
    xp = jnp.pad(xp, ((0, 0), (0, 0), (0, Hp2 - Hp), (0, Wp2 - Wp)))
    Hph, Wph = Hp2 // sh, Wp2 // sw
    L = Hph * Wph
    CH = H_out * Wph          # per-image output chunk (incl. Wph-W_out garbage cols per row)

    # --- space-to-depth phase relayout: (N, Cin, Hp2, Wp2) -> (N, sh*sw, Cin, Hph*Wph), bf16.
    #     Same HBM footprint as the padded input (no KH*KW im2col blow-up); the flattened
    #     spatial axis lands on the lane dimension.
    xph = xp.reshape(N, Cin, Hph, sh, Wph, sw)
    xph = xph.transpose(0, 3, 5, 1, 2, 4).reshape(N, sh * sw, Cin, L)
    xph = xph.astype(jnp.bfloat16)

    # weight -> (KH*KW, Cout, Cin) bf16 taps; bias -> (Cout, 1) f32
    w_taps = weight.transpose(2, 3, 0, 1).reshape(KH * KW, Cout, Cin).astype(jnp.bfloat16)
    b2 = bias.reshape(Cout, 1).astype(jnp.float32)

    kernel = functools.partial(
        _fused_conv_kernel,
        KH=KH, KW=KW, sh=sh, sw=sw, Cin=Cin, Wph=Wph, CH=CH)

    out = pl.pallas_call(
        kernel,
        out_shape=jax.ShapeDtypeStruct((N, Cout, CH), jnp.float32),
        grid_spec=pltpu.PrefetchScalarGridSpec(
            num_scalar_prefetch=0,
            grid=(N,),                                       # >=2 steps: both v7x TCs busy
            in_specs=[
                pl.BlockSpec((1, sh * sw, Cin, L), lambda n: (n, 0, 0, 0)),   # streamed image
                pl.BlockSpec((KH * KW, Cout, Cin), lambda n: (0, 0, 0)),      # resident weights
                pl.BlockSpec((Cout, 1), lambda n: (0, 0)),                    # resident bias
            ],
            out_specs=pl.BlockSpec((1, Cout, CH), lambda n: (n, 0, 0)),       # lane-dense store
        ),
        compiler_params=pltpu.CompilerParams(
            dimension_semantics=("parallel",),
            vmem_limit_bytes=48 * 1024 * 1024,   # > 16/32 MiB scoped default, < v7x 64 MiB
        ),
    )(xph, w_taps, b2)

    # Strip the per-row garbage columns and return NCHW.
    out = out.reshape(N, Cout, H_out, Wph)[:, :, :, :W_out]
    return out.astype(x.dtype)


if __name__ == "__main__":
    # Module config (matches Conv2dStaticSamePadding(__init__) shapes)
    N, Cin, H, W = 2, 4, 16, 16
    Cout, KH, KW = 8, 3, 3
    stride = (2, 2)

    key = jax.random.PRNGKey(0)
    kx, kw_, kb = jax.random.split(key, 3)

    x = jax.random.normal(kx, (N, Cin, H, W), dtype=jnp.float32)
    # deterministic synthetic params (PyTorch-like kaiming-uniform scale)
    fan_in = Cin * KH * KW
    bound = 1.0 / math.sqrt(fan_in)
    weight = jax.random.uniform(kw_, (Cout, Cin, KH, KW),
                                minval=-bound, maxval=bound, dtype=jnp.float32)
    bias = jax.random.uniform(kb, (Cout,), minval=-bound, maxval=bound,
                              dtype=jnp.float32)

    fn = jax.jit(lambda a, w, b: conv2d_static_same_padding(a, w, b, stride))
    out = jax.block_until_ready(fn(x, weight, bias))

    # Reference: f32 conv with the same explicit SAME padding. The kernel streams
    # activations/weights in bf16 (f32 accumulation), hence the 2e-2 tolerance.
    extra_h = (math.ceil(W / stride[1]) - 1) * stride[1] - W + KW
    extra_v = (math.ceil(H / stride[0]) - 1) * stride[0] - H + KH
    left, top = extra_h // 2, extra_v // 2
    right, bottom = extra_h - left, extra_v - top
    ref = lax.conv_general_dilated(
        x, weight, window_strides=stride,
        padding=((top, bottom), (left, right)),
        dimension_numbers=("NCHW", "OIHW", "NCHW"),
    ) + bias.reshape(1, Cout, 1, 1)

    assert out.shape == ref.shape, (out.shape, ref.shape)
    np.testing.assert_allclose(np.asarray(out), np.asarray(ref),
                               rtol=2e-2, atol=2e-2)
    print("KERNEL_OK")
</pallas_src>

<mosaic_0001>
module attributes {stable_mosaic.version = 11 : i64} {
  func.func @_fused_conv_kernel(%arg0: i32, %arg1: memref<1x4x4x90xbf16, #tpu.memory_space<vmem>>, %arg2: memref<9x8x4xbf16, #tpu.memory_space<vmem>>, %arg3: memref<8x1xf32, #tpu.memory_space<vmem>>, %arg4: memref<1x8x72xf32, #tpu.memory_space<vmem>>) attributes {dimension_semantics = [#tpu.dimension_semantics<parallel>], iteration_bounds = array<i64: 2>, scalar_prefetch = 0 : i64, scratch_operands = 0 : i64, tpu.core_type = #tpu.core_type<tc>, window_params = [{transform_indices = @transform_0, window_bounds = array<i64: 1, 4, 4, 90>}, {pipeline_mode = #tpu.pipeline_mode<synchronous>, transform_indices = @transform_1, window_bounds = array<i64: 9, 8, 4>}, {pipeline_mode = #tpu.pipeline_mode<synchronous>, transform_indices = @transform_2, window_bounds = array<i64: 8, 1>}, {transform_indices = @transform_3, window_bounds = array<i64: 1, 8, 72>}]} {
    %cst = arith.constant 0.000000e+00 : f32
    %0 = vector.broadcast %cst : f32 to vector<8x72xf32>
    %c0 = arith.constant 0 : index
    %c0_0 = arith.constant 0 : index
    %c0_1 = arith.constant 0 : index
    %c0_2 = arith.constant 0 : index
    %1 = vector.load %arg1[%c0, %c0_0, %c0_1, %c0_2] : memref<1x4x4x90xbf16, #tpu.memory_space<vmem>>, vector<1x1x4x72xbf16>
    %2 = vector.shape_cast %1 : vector<1x1x4x72xbf16> to vector<4x72xbf16>
    %c0_3 = arith.constant 0 : index
    %c0_4 = arith.constant 0 : index
    %c0_5 = arith.constant 0 : index
    %3 = vector.load %arg2[%c0_3, %c0_4, %c0_5] : memref<9x8x4xbf16, #tpu.memory_space<vmem>>, vector<1x8x4xbf16>
    %4 = vector.shape_cast %3 : vector<1x8x4xbf16> to vector<8x4xbf16>
    %cst_6 = arith.constant dense<0.000000e+00> : vector<8x72xf32>
    %5 = tpu.matmul %4, %2, %cst_6 {dimension_numbers = #tpu.dot_dimension_numbers<[1], [0], [0], [1], [0, 0, 1, 1], [], []>} : vector<8x4xbf16>, vector<4x72xbf16>, vector<8x72xf32> -> vector<8x72xf32>
    %6 = arith.addf %0, %5 : vector<8x72xf32>
    %c0_7 = arith.constant 0 : index
    %c1 = arith.constant 1 : index
    %c0_8 = arith.constant 0 : index
    %c0_9 = arith.constant 0 : index
    %7 = vector.load %arg1[%c0_7, %c1, %c0_8, %c0_9] : memref<1x4x4x90xbf16, #tpu.memory_space<vmem>>, vector<1x1x4x72xbf16>
    %8 = vector.shape_cast %7 : vector<1x1x4x72xbf16> to vector<4x72xbf16>
    %c1_10 = arith.constant 1 : index
    %c0_11 = arith.constant 0 : index
    %c0_12 = arith.constant 0 : index
    %9 = vector.load %arg2[%c1_10, %c0_11, %c0_12] : memref<9x8x4xbf16, #tpu.memory_space<vmem>>, vector<1x8x4xbf16>
    %10 = vector.shape_cast %9 : vector<1x8x4xbf16> to vector<8x4xbf16>
    %cst_13 = arith.constant dense<0.000000e+00> : vector<8x72xf32>
    %11 = tpu.matmul %10, %8, %cst_13 {dimension_numbers = #tpu.dot_dimension_numbers<[1], [0], [0], [1], [0, 0, 1, 1], [], []>} : vector<8x4xbf16>, vector<4x72xbf16>, vector<8x72xf32> -> vector<8x72xf32>
    %12 = arith.addf %6, %11 : vector<8x72xf32>
    %c0_14 = arith.constant 0 : index
    %c0_15 = arith.constant 0 : index
    %c0_16 = arith.constant 0 : index
    %c1_17 = arith.constant 1 : index
    %13 = vector.load %arg1[%c0_14, %c0_15, %c0_16, %c1_17] : memref<1x4x4x90xbf16, #tpu.memory_space<vmem>>, vector<1x1x4x72xbf16>
    %14 = vector.shape_cast %13 : vector<1x1x4x72xbf16> to vector<4x72xbf16>
    %c2 = arith.constant 2 : index
    %c0_18 = arith.constant 0 : index
    %c0_19 = arith.constant 0 : index
    %15 = vector.load %arg2[%c2, %c0_18, %c0_19] : memref<9x8x4xbf16, #tpu.memory_space<vmem>>, vector<1x8x4xbf16>
    %16 = vector.shape_cast %15 : vector<1x8x4xbf16> to vector<8x4xbf16>
    %cst_20 = arith.constant dense<0.000000e+00> : vector<8x72xf32>
    %17 = tpu.matmul %16, %14, %cst_20 {dimension_numbers = #tpu.dot_dimension_numbers<[1], [0], [0], [1], [0, 0, 1, 1], [], []>} : vector<8x4xbf16>, vector<4x72xbf16>, vector<8x72xf32> -> vector<8x72xf32>
    %18 = arith.addf %12, %17 : vector<8x72xf32>
    %c0_21 = arith.constant 0 : index
    %c2_22 = arith.constant 2 : index
    %c0_23 = arith.constant 0 : index
    %c0_24 = arith.constant 0 : index
    %19 = vector.load %arg1[%c0_21, %c2_22, %c0_23, %c0_24] : memref<1x4x4x90xbf16, #tpu.memory_space<vmem>>, vector<1x1x4x72xbf16>
    %20 = vector.shape_cast %19 : vector<1x1x4x72xbf16> to vector<4x72xbf16>
    %c3 = arith.constant 3 : index
    %c0_25 = arith.constant 0 : index
    %c0_26 = arith.constant 0 : index
    %21 = vector.load %arg2[%c3, %c0_25, %c0_26] : memref<9x8x4xbf16, #tpu.memory_space<vmem>>, vector<1x8x4xbf16>
    %22 = vector.shape_cast %21 : vector<1x8x4xbf16> to vector<8x4xbf16>
    %cst_27 = arith.constant dense<0.000000e+00> : vector<8x72xf32>
    %23 = tpu.matmul %22, %20, %cst_27 {dimension_numbers = #tpu.dot_dimension_numbers<[1], [0], [0], [1], [0, 0, 1, 1], [], []>} : vector<8x4xbf16>, vector<4x72xbf16>, vector<8x72xf32> -> vector<8x72xf32>
    %24 = arith.addf %18, %23 : vector<8x72xf32>
    %c0_28 = arith.constant 0 : index
    %c3_29 = arith.constant 3 : index
    %c0_30 = arith.constant 0 : index
    %c0_31 = arith.constant 0 : index
    %25 = vector.load %arg1[%c0_28, %c3_29, %c0_30, %c0_31] : memref<1x4x4x90xbf16, #tpu.memory_space<vmem>>, vector<1x1x4x72xbf16>
    %26 = vector.shape_cast %25 : vector<1x1x4x72xbf16> to vector<4x72xbf16>
    %c4 = arith.constant 4 : index
    %c0_32 = arith.constant 0 : index
    %c0_33 = arith.constant 0 : index
    %27 = vector.load %arg2[%c4, %c0_32, %c0_33] : memref<9x8x4xbf16, #tpu.memory_space<vmem>>, vector<1x8x4xbf16>
    %28 = vector.shape_cast %27 : vector<1x8x4xbf16> to vector<8x4xbf16>
    %cst_34 = arith.constant dense<0.000000e+00> : vector<8x72xf32>
    %29 = tpu.matmul %28, %26, %cst_34 {dimension_numbers = #tpu.dot_dimension_numbers<[1], [0], [0], [1], [0, 0, 1, 1], [], []>} : vector<8x4xbf16>, vector<4x72xbf16>, vector<8x72xf32> -> vector<8x72xf32>
    %30 = arith.addf %24, %29 : vector<8x72xf32>
    %c0_35 = arith.constant 0 : index
    %c2_36 = arith.constant 2 : index
    %c0_37 = arith.constant 0 : index
    %c1_38 = arith.constant 1 : index
    %31 = vector.load %arg1[%c0_35, %c2_36, %c0_37, %c1_38] : memref<1x4x4x90xbf16, #tpu.memory_space<vmem>>, vector<1x1x4x72xbf16>
    %32 = vector.shape_cast %31 : vector<1x1x4x72xbf16> to vector<4x72xbf16>
    %c5 = arith.constant 5 : index
    %c0_39 = arith.constant 0 : index
    %c0_40 = arith.constant 0 : index
    %33 = vector.load %arg2[%c5, %c0_39, %c0_40] : memref<9x8x4xbf16, #tpu.memory_space<vmem>>, vector<1x8x4xbf16>
    %34 = vector.shape_cast %33 : vector<1x8x4xbf16> to vector<8x4xbf16>
    %cst_41 = arith.constant dense<0.000000e+00> : vector<8x72xf32>
    %35 = tpu.matmul %34, %32, %cst_41 {dimension_numbers = #tpu.dot_dimension_numbers<[1], [0], [0], [1], [0, 0, 1, 1], [], []>} : vector<8x4xbf16>, vector<4x72xbf16>, vector<8x72xf32> -> vector<8x72xf32>
    %36 = arith.addf %30, %35 : vector<8x72xf32>
    %c0_42 = arith.constant 0 : index
    %c0_43 = arith.constant 0 : index
    %c0_44 = arith.constant 0 : index
    %c9 = arith.constant 9 : index
    %37 = vector.load %arg1[%c0_42, %c0_43, %c0_44, %c9] : memref<1x4x4x90xbf16, #tpu.memory_space<vmem>>, vector<1x1x4x72xbf16>
    %38 = vector.shape_cast %37 : vector<1x1x4x72xbf16> to vector<4x72xbf16>
    %c6 = arith.constant 6 : index
    %c0_45 = arith.constant 0 : index
    %c0_46 = arith.constant 0 : index
    %39 = vector.load %arg2[%c6, %c0_45, %c0_46] : memref<9x8x4xbf16, #tpu.memory_space<vmem>>, vector<1x8x4xbf16>
    %40 = vector.shape_cast %39 : vector<1x8x4xbf16> to vector<8x4xbf16>
    %cst_47 = arith.constant dense<0.000000e+00> : vector<8x72xf32>
    %41 = tpu.matmul %40, %38, %cst_47 {dimension_numbers = #tpu.dot_dimension_numbers<[1], [0], [0], [1], [0, 0, 1, 1], [], []>} : vector<8x4xbf16>, vector<4x72xbf16>, vector<8x72xf32> -> vector<8x72xf32>
    %42 = arith.addf %36, %41 : vector<8x72xf32>
    %c0_48 = arith.constant 0 : index
    %c1_49 = arith.constant 1 : index
    %c0_50 = arith.constant 0 : index
    %c9_51 = arith.constant 9 : index
    %43 = vector.load %arg1[%c0_48, %c1_49, %c0_50, %c9_51] : memref<1x4x4x90xbf16, #tpu.memory_space<vmem>>, vector<1x1x4x72xbf16>
    %44 = vector.shape_cast %43 : vector<1x1x4x72xbf16> to vector<4x72xbf16>
    %c7 = arith.constant 7 : index
    %c0_52 = arith.constant 0 : index
    %c0_53 = arith.constant 0 : index
    %45 = vector.load %arg2[%c7, %c0_52, %c0_53] : memref<9x8x4xbf16, #tpu.memory_space<vmem>>, vector<1x8x4xbf16>
    %46 = vector.shape_cast %45 : vector<1x8x4xbf16> to vector<8x4xbf16>
    %cst_54 = arith.constant dense<0.000000e+00> : vector<8x72xf32>
    %47 = tpu.matmul %46, %44, %cst_54 {dimension_numbers = #tpu.dot_dimension_numbers<[1], [0], [0], [1], [0, 0, 1, 1], [], []>} : vector<8x4xbf16>, vector<4x72xbf16>, vector<8x72xf32> -> vector<8x72xf32>
    %48 = arith.addf %42, %47 : vector<8x72xf32>
    %c0_55 = arith.constant 0 : index
    %c0_56 = arith.constant 0 : index
    %c0_57 = arith.constant 0 : index
    %c10 = arith.constant 10 : index
    %49 = vector.load %arg1[%c0_55, %c0_56, %c0_57, %c10] : memref<1x4x4x90xbf16, #tpu.memory_space<vmem>>, vector<1x1x4x72xbf16>
    %50 = vector.shape_cast %49 : vector<1x1x4x72xbf16> to vector<4x72xbf16>
    %c8 = arith.constant 8 : index
    %c0_58 = arith.constant 0 : index
    %c0_59 = arith.constant 0 : index
    %51 = vector.load %arg2[%c8, %c0_58, %c0_59] : memref<9x8x4xbf16, #tpu.memory_space<vmem>>, vector<1x8x4xbf16>
    %52 = vector.shape_cast %51 : vector<1x8x4xbf16> to vector<8x4xbf16>
    %cst_60 = arith.constant dense<0.000000e+00> : vector<8x72xf32>
    %53 = tpu.matmul %52, %50, %cst_60 {dimension_numbers = #tpu.dot_dimension_numbers<[1], [0], [0], [1], [0, 0, 1, 1], [], []>} : vector<8x4xbf16>, vector<4x72xbf16>, vector<8x72xf32> -> vector<8x72xf32>
    %54 = arith.addf %48, %53 : vector<8x72xf32>
    %c0_61 = arith.constant 0 : index
    %c0_62 = arith.constant 0 : index
    %55 = vector.load %arg3[%c0_61, %c0_62] : memref<8x1xf32, #tpu.memory_space<vmem>>, vector<8x1xf32>
    %56 = vector.broadcast %55 : vector<8x1xf32> to vector<8x72xf32>
    %57 = arith.addf %54, %56 : vector<8x72xf32>
    %58 = vector.shape_cast %57 : vector<8x72xf32> to vector<1x8x72xf32>
    %c0_63 = arith.constant 0 : index
    %c0_64 = arith.constant 0 : index
    %c0_65 = arith.constant 0 : index
    %59 = vector.load %arg4[%c0_63, %c0_64, %c0_65] : memref<1x8x72xf32, #tpu.memory_space<vmem>>, vector<1x8x72xf32>
    tpu.vector_store %arg4[%c0_63, %c0_64, %c0_65], %58 {strides = array<i32>} : memref<1x8x72xf32, #tpu.memory_space<vmem>>, vector<1x8x72xf32>,
    return
  }
  func.func @transform_0(%arg0: i32) -> (i32, i32, i32, i32) {
    %c0_i32 = arith.constant 0 : i32
    %c0_i32_0 = arith.constant 0 : i32
    %c0_i32_1 = arith.constant 0 : i32
    %c0_i32_2 = arith.constant 0 : i32
    return %arg0, %c0_i32, %c0_i32_0, %c0_i32_1 : i32, i32, i32, i32
  }
  func.func @transform_1(%arg0: i32) -> (i32, i32, i32) {
    %c0_i32 = arith.constant 0 : i32
    %c0_i32_0 = arith.constant 0 : i32
    %c0_i32_1 = arith.constant 0 : i32
    %c0_i32_2 = arith.constant 0 : i32
    return %c0_i32, %c0_i32_0, %c0_i32_1 : i32, i32, i32
  }
  func.func @transform_2(%arg0: i32) -> (i32, i32) {
    %c0_i32 = arith.constant 0 : i32
    %c0_i32_0 = arith.constant 0 : i32
    %c0_i32_1 = arith.constant 0 : i32
    return %c0_i32, %c0_i32_0 : i32, i32
  }
  func.func @transform_3(%arg0: i32) -> (i32, i32, i32) {
    %c0_i32 = arith.constant 0 : i32
    %c0_i32_0 = arith.constant 0 : i32
    %c0_i32_1 = arith.constant 0 : i32
    return %arg0, %c0_i32, %c0_i32_0 : i32, i32, i32
  }
}

</mosaic_0001>

<llo_original>
// kernel: _lambda_.1
$region0: #{_lambda_.1}
  #allocation0 [shape = 'u32[]', space=smem, size = 0x4, offset = 0x4, fixed_abs, tag = 'smem constant byte address 0x4 - core index']
  #allocation1 [shape = 'u32[144,128]{1,0:T(1,128)}', space=vmem, size = 0x12000, scoped, tag = 'internal scratch']
  %s0 = inlined_call_operand.vmem [shape: bf16[2,4,4,90], index: 0, kind: input, shape index: {}]
  %s1 = inlined_call_operand.vmem [shape: bf16[9,8,4], index: 1, kind: input, shape index: {}]
  %s2 = inlined_call_operand.vmem [shape: f32[8,1], index: 2, kind: input, shape index: {}]
  %s3 = inlined_call_operand.vmem [shape: f32[2,8,72], index: 3, kind: output, shape index: {}]
  %s4 = sld [smem:[#allocation0]]
  $region45: #{_lambda_.1} parent=0
    _
  %s6 = ssub.s32 1, %s4
  %s7 = scalar_select 0, %s6, %s4
  loop: start=0, step=1, limit=4
  $region2: #{_lambda_.1} parent=0 // loop_pre_header
    _
  $region3: #{_lambda_.1} parent=0 // loop_header
    %s9 = sphi 0, %s13
    %p10 = scmp.ge.s32.totalorder %s9, 4
    %s19 = sphi 0, %s21
    %s22 = sphi 0, %s19
    %s23 = sphi 0, %s22
    %s39 = sphi 0, %s23
    %s43 = sphi 0, %s43
    %s45 = sphi 0, %s43
    %s46 = sphi 0, %s45
    %s60 = sphi 0, %s46
    %s64 = sphi 0, %s64
    %s66 = sphi 0, %s64
    %s67 = sphi 0, %s66
    %s81 = sphi 0, %s67
    %s87 = sphi 0, %s89
    %s90 = sphi 0, %s87
    %s91 = sphi 0, %s90
    %s107 = sphi 0, %s91
  $region4: #{_lambda_.1} parent=0 // loop_header_branch
    %12 = sbr.rel (%p10) target = $region8
  $region5: #{_lambda_.1} parent=0 // loop_body
    %s14 = ssub.s32 %s9, 1
    %s15 = ssub.s32 %s9, 2
    %s16 = sadd.s32 %s9, 1
    %s17 = ssub.s32 %s9, %s16
    %p18 = scmp.eq.s32.totalorder %s17, 0
    %s20 = sadd.s32 %s19, 1
    %s21 = scalar_select %p18, %s19, %s20
    %p24 = pneg %p18
    %p25 = scmp.eq.s32.totalorder %s9, 1
    %p26 = por %p24, %p25
    %p27 = scmp.ne.s32.totalorder %s19, %s22
    %p28 = scmp.eq.s32.totalorder %s9, 0
    %p29 = por %p27, %p28
    %p30 = scmp.ne.s32.totalorder %s19, %s22
    %p31 = scmp.eq.s32.totalorder %s14, 1
    %p32 = por %p30, %p31
    %p33 = scmp.ne.s32.totalorder %s22, %s23
    %p34 = scmp.eq.s32.totalorder %s14, 0
    %p35 = por %p33, %p34
    %p36 = scmp.ne.s32.totalorder %s22, %s23
    %p37 = scmp.eq.s32.totalorder %s15, 1
    %p38 = por %p36, %p37
    %p40 = scmp.ne.s32.totalorder %s23, %s39
    %p41 = scmp.eq.s32.totalorder %s15, 0
    %p42 = por %p40, %p41
    %s44 = sadd.s32 %s43, 1
    %p47 = scmp.eq.s32.totalorder %s9, 1
    %p48 = scmp.ne.s32.totalorder %s43, %s45
    %p49 = scmp.eq.s32.totalorder %s9, 0
    %p50 = por %p48, %p49
    %p51 = scmp.ne.s32.totalorder %s43, %s45
    %p52 = scmp.eq.s32.totalorder %s14, 1
    %p53 = por %p51, %p52
    %p54 = scmp.ne.s32.totalorder %s45, %s46
    %p55 = scmp.eq.s32.totalorder %s14, 0
    %p56 = por %p54, %p55
    %p57 = scmp.ne.s32.totalorder %s45, %s46
    %p58 = scmp.eq.s32.totalorder %s15, 1
    %p59 = por %p57, %p58
    %p61 = scmp.ne.s32.totalorder %s46, %s60
    %p62 = scmp.eq.s32.totalorder %s15, 0
    %p63 = por %p61, %p62
    %s65 = sadd.s32 %s64, 1
    %p68 = scmp.eq.s32.totalorder %s9, 1
    %p69 = scmp.ne.s32.totalorder %s64, %s66
    %p70 = scmp.eq.s32.totalorder %s9, 0
    %p71 = por %p69, %p70
    %p72 = scmp.ne.s32.totalorder %s64, %s66
    %p73 = scmp.eq.s32.totalorder %s14, 1
    %p74 = por %p72, %p73
    %p75 = scmp.ne.s32.totalorder %s66, %s67
    %p76 = scmp.eq.s32.totalorder %s14, 0
    %p77 = por %p75, %p76
    %p78 = scmp.ne.s32.totalorder %s66, %s67
    %p79 = scmp.eq.s32.totalorder %s15, 1
    %p80 = por %p78, %p79
    %p82 = scmp.ne.s32.totalorder %s67, %s81
    %p83 = scmp.eq.s32.totalorder %s15, 0
    %p84 = por %p82, %p83
    %s85 = ssub.s32 %s9, %s16
    %p86 = scmp.eq.s32.totalorder %s85, 0
    %s88 = sadd.s32 %s87, 1
    %s89 = scalar_select %p86, %s87, %s88
    %p92 = pneg %p86
    %p93 = scmp.eq.s32.totalorder %s9, 1
    %p94 = por %p92, %p93
    %p95 = scmp.ne.s32.totalorder %s87, %s90
    %p96 = scmp.eq.s32.totalorder %s9, 0
    %p97 = por %p95, %p96
    %p98 = scmp.ne.s32.totalorder %s87, %s90
    %p99 = scmp.eq.s32.totalorder %s14, 1
    %p100 = por %p98, %p99
    %p101 = scmp.ne.s32.totalorder %s90, %s91
    %p102 = scmp.eq.s32.totalorder %s14, 0
    %p103 = por %p101, %p102
    %p104 = scmp.ne.s32.totalorder %s90, %s91
    %p105 = scmp.eq.s32.totalorder %s15, 1
    %p106 = por %p104, %p105
    %p108 = scmp.ne.s32.totalorder %s91, %s107
    %p109 = scmp.eq.s32.totalorder %s15, 0
    %p110 = por %p108, %p109
    %p111 = scmp.le.s32.totalorder 1, %s9
    %p112 = scmp.lt.s32.totalorder %s9, 3
    %p113 = pnand %p111, %p112
    %p114 = pneg %p113
    // Predicated region
    $region9: #{_lambda_.1} parent=5 // pred_check
      _
    $region10: #{_lambda_.1} parent=5 // pred_check_branch
      %116 = sbr.rel (%p113) target = $region12
    $region11: #{_lambda_.1} parent=5 // pred_region
      %s117 = ssub.s32 %s9, 1
      // Predicated region
      $region13: #{_lambda_.1} parent=11 // pred_check
        %p118 = pneg %p56
      $region14: #{_lambda_.1} parent=11 // pred_check_branch
        %120 = sbr.rel (%p118) target = $region16
      $region15: #{_lambda_.1} parent=11 // pred_region
        _
      $region16: #{_lambda_.1} parent=11 // pred_fallthru
        _
      // Predicated region
      $region17: #{_lambda_.1} parent=11 // pred_check
        %p121 = pneg %p77
      $region18: #{_lambda_.1} parent=11 // pred_check_branch
        %123 = sbr.rel (%p121) target = $region20
      $region19: #{_lambda_.1} parent=11 // pred_region
        _
      $region20: #{_lambda_.1} parent=11 // pred_fallthru
        _
    $region12: #{_lambda_.1} parent=5 // pred_fallthru
      _
    %p124 = scmp.lt.s32.totalorder %s9, 2
    // Predicated region
    $region21: #{_lambda_.1} parent=5 // pred_check
      %p125 = pneg %p124
    $region22: #{_lambda_.1} parent=5 // pred_check_branch
      %127 = sbr.rel (%p125) target = $region24
    $region23: #{_lambda_.1} parent=5 // pred_region
      // Predicated region
      $region25: #{_lambda_.1} parent=23 // pred_check
        %p128 = pneg %p29
      $region26: #{_lambda_.1} parent=23 // pred_check_branch
        %130 = sbr.rel (%p128) target = $region28
      $region27: #{_lambda_.1} parent=23 // pred_region
        %p131 = scmp.lt.s32.totalorder %s9, 1
        %s132 = scalar_select %p131, %s9, 1
        %s133 = smul.addr %s132, 4
        %s134 = smul.addr %s133, 2
        %s135 = scalar_lea.vmem %s0, %s134
      $region28: #{_lambda_.1} parent=23 // pred_fallthru
        _
    $region24: #{_lambda_.1} parent=5 // pred_fallthru
      _
    %p136 = scmp.le.s32.totalorder 1, %s9
    %p137 = scmp.lt.s32.totalorder %s9, 3
    %p138 = pnand %p136, %p137
    %p139 = pneg %p138
    // Predicated region
    $region29: #{_lambda_.1} parent=5 // pred_check
      _
    $region30: #{_lambda_.1} parent=5 // pred_check_branch
      %141 = sbr.rel (%p138) target = $region32
    $region31: #{_lambda_.1} parent=5 // pred_region
      %s142 = ssub.s32 %s9, 1
      %p143 = scmp.lt.s32.totalorder %s14, 1
      %s144 = scalar_select %p143, %s14, 1
      %s145 = smul.addr %s144, 4
      %s146 = smul.addr %s145, 2
      %s147 = scalar_lea.vmem %s0, %s146
      %p148 = pneg %p35
      %p149 = pneg %p32
      %p150 = pneg %p56
      %p151 = pneg %p53
      %p152 = pneg %p77
      %p153 = pneg %p74
      %p154 = pneg %p103
      %p155 = pneg %p100
      %p156 = scmp.lt.s32.totalorder %s14, 1
      %s157 = scalar_select %p156, %s14, 1
      %s158 = smul.addr %s157, 8
      %s159 = scalar_lea.vmem %s3, %s158
      %p160 = scmp.lt.s32.totalorder %s14, 1
      %s161 = scalar_select %p160, %s14, 1
      %s162 = smul.addr %s161, 4
      %s163 = smul.addr %s162, 2
      %s164 = scalar_lea.vmem %s0, %s163
      %p165 = scmp.lt.s32.totalorder %s14, 1
      %s166 = scalar_select %p165, %s14, 1
      %s167 = smul.addr %s166, 8
      %s168 = scalar_lea.vmem %s3, %s167
      %v170 = vld [vmem:[%s164] sm:$0x3]
      %v171 = vld [vmem:[%s1] sm:$0xf]
      %s172 = scalar_lea.vmem %s164, 2
      %v173 = vld [vmem:[%s172] sm:$0x3]
      %s174 = scalar_lea.vmem %s1, 4
      %v175 = vld [vmem:[%s174] sm:$0xf]
      %vm176 = vcmask 31744
      %v178 = vsel %vm176, %v175, 0
      %vm180 = vcmask 1041408
      %v182 = vsel %vm180, %v173, 0
      %184 = vmatprep.subr.bf16.mxu0 0
      %185 = vmatpush1.bf16.msra.mxu0 %v182
      %186 = vmatprep.subr.bf16.mxu0 0
      %187 = vmatpush1.bf16.msra.mxu0 0
      %188 = vmatprep.subr.bf16.mxu0 0
      %189 = vmatpush1.bf16.msra.mxu0 0
      %190 = vmatprep.subr.bf16.mxu0 0
      %191 = vmatpush1.bf16.msra.mxu0 0
      %192 = vmatprep.subr.bf16.mxu0 0
      %193 = vmatpush1.bf16.msra.mxu0 0
      %194 = vmatprep.subr.bf16.mxu0 0
      %195 = vmatpush1.bf16.msra.mxu0 0
      %196 = vmatprep.subr.bf16.mxu0 0
      %197 = vmatpush1.bf16.msra.mxu0 0
      %198 = vmatprep.subr.bf16.mxu0 0
      %199 = vmatpush1.bf16.msra.mxu0 0
      %200 = vmatprep.subr.bf16.mxu0 0
      %201 = vmatpush1.bf16.msra.mxu0 0
      %202 = vmatprep.subr.bf16.mxu0 0
      %203 = vmatpush1.bf16.msra.mxu0 0
      %204 = vmatprep.subr.bf16.mxu0 0
      %205 = vmatpush1.bf16.msra.mxu0 0
      %206 = vmatprep.subr.bf16.mxu0 0
      %207 = vmatpush1.bf16.msra.mxu0 0
      %208 = vmatprep.subr.bf16.mxu0 0
      %209 = vmatpush1.bf16.msra.mxu0 0
      %210 = vmatprep.subr.bf16.mxu0 0
      %211 = vmatpush1.bf16.msra.mxu0 0
      %212 = vmatprep.subr.bf16.mxu0 0
      %213 = vmatpush1.bf16.msra.mxu0 0
      %214 = vmatprep.subr.bf16.mxu0 0
      %215 = vmatpush1.bf16.msra.mxu0 0
      %216 = vmatprep.mubr.bf16.mxu0 0
      %217 = vmatmul.mubr.bf16.gmra.mrb[0].mxu0 %v178
      %v218 = vpop.f32.mrb[0].mxu0
      %v219 = vadd.f32 0.0, %v218
      %v220 = vpop.f32.mrb[0].mxu0
      %v221 = vpop.f32.mrb[0].mxu0
      %v222 = vpop.f32.mrb[0].mxu0
      %223 = vdwg.mxu0
      %v225 = vsel %vm176, %v171, 0
      %v228 = vsel %vm180, %v170, 0
      %230 = vmatprep.subr.bf16.mxu0 0
      %231 = vmatpush1.bf16.msra.mxu0 %v228
      %232 = vmatprep.subr.bf16.mxu0 0
      %233 = vmatpush1.bf16.msra.mxu0 0
      %234 = vmatprep.subr.bf16.mxu0 0
      %235 = vmatpush1.bf16.msra.mxu0 0
      %236 = vmatprep.subr.bf16.mxu0 0
      %237 = vmatpush1.bf16.msra.mxu0 0
      %238 = vmatprep.subr.bf16.mxu0 0
      %239 = vmatpush1.bf16.msra.mxu0 0
      %240 = vmatprep.subr.bf16.mxu0 0
      %241 = vmatpush1.bf16.msra.mxu0 0
      %242 = vmatprep.subr.bf16.mxu0 0
      %243 = vmatpush1.bf16.msra.mxu0 0
      %244 = vmatprep.subr.bf16.mxu0 0
      %245 = vmatpush1.bf16.msra.mxu0 0
      %246 = vmatprep.subr.bf16.mxu0 0
      %247 = vmatpush1.bf16.msra.mxu0 0
      %248 = vmatprep.subr.bf16.mxu0 0
      %249 = vmatpush1.bf16.msra.mxu0 0
      %250 = vmatprep.subr.bf16.mxu0 0
      %251 = vmatpush1.bf16.msra.mxu0 0
      %252 = vmatprep.subr.bf16.mxu0 0
      %253 = vmatpush1.bf16.msra.mxu0 0
      %254 = vmatprep.subr.bf16.mxu0 0
      %255 = vmatpush1.bf16.msra.mxu0 0
      %256 = vmatprep.subr.bf16.mxu0 0
      %257 = vmatpush1.bf16.msra.mxu0 0
      %258 = vmatprep.subr.bf16.mxu0 0
      %259 = vmatpush1.bf16.msra.mxu0 0
      %260 = vmatprep.subr.bf16.mxu0 0
      %261 = vmatpush1.bf16.msra.mxu0 0
      %262 = vmatprep.mubr.bf16.mxu0 0
      %263 = vmatmul.mubr.bf16.gmra.mrb[0].mxu0 %v225
      %v264 = vpop.f32.mrb[0].mxu0
      %v265 = vadd.f32 %v219, %v264
      %v266 = vpop.f32.mrb[0].mxu0
      %v267 = vpop.f32.mrb[0].mxu0
      %v268 = vpop.f32.mrb[0].mxu0
      %269 = vdwg.mxu0
      %s270 = scalar_lea.vmem %s1, 8
      %v271 = vld [vmem:[%s270] sm:$0xf]
      %v274 = vunpack.c.l.s4 1983009808
      %v275 = vunpack.c.0.s8 %v274
      %v276 = vlaneseq
      %v277 = vshrl.u32 %v276, 7
      %v278 = vsub.s32 %v275, %v277
      %v279 = vrot.slane %v170, %v278
      %280 = vrot.lane.b32.xlu0 %v279, 127
      %v281 = vpop.permute.xlu0 %280
      %v283 = vsel %vm176, %v271, 0
      %v286 = vsel %vm180, %v281, 0
      %288 = vmatprep.subr.bf16.mxu0 0
      %289 = vmatpush1.bf16.msra.mxu0 %v286
      %290 = vmatprep.subr.bf16.mxu0 0
      %291 = vmatpush1.bf16.msra.mxu0 0
      %292 = vmatprep.subr.bf16.mxu0 0
      %293 = vmatpush1.bf16.msra.mxu0 0
      %294 = vmatprep.subr.bf16.mxu0 0
      %295 = vmatpush1.bf16.msra.mxu0 0
      %296 = vmatprep.subr.bf16.mxu0 0
      %297 = vmatpush1.bf16.msra.mxu0 0
      %298 = vmatprep.subr.bf16.mxu0 0
      %299 = vmatpush1.bf16.msra.mxu0 0
      %300 = vmatprep.subr.bf16.mxu0 0
      %301 = vmatpush1.bf16.msra.mxu0 0
      %302 = vmatprep.subr.bf16.mxu0 0
      %303 = vmatpush1.bf16.msra.mxu0 0
      %304 = vmatprep.subr.bf16.mxu0 0
      %305 = vmatpush1.bf16.msra.mxu0 0
      %306 = vmatprep.subr.bf16.mxu0 0
      %307 = vmatpush1.bf16.msra.mxu0 0
      %308 = vmatprep.subr.bf16.mxu0 0
      %309 = vmatpush1.bf16.msra.mxu0 0
      %310 = vmatprep.subr.bf16.mxu0 0
      %311 = vmatpush1.bf16.msra.mxu0 0
      %312 = vmatprep.subr.bf16.mxu0 0
      %313 = vmatpush1.bf16.msra.mxu0 0
      %314 = vmatprep.subr.bf16.mxu0 0
      %315 = vmatpush1.bf16.msra.mxu0 0
      %316 = vmatprep.subr.bf16.mxu0 0
      %317 = vmatpush1.bf16.msra.mxu0 0
      %318 = vmatprep.subr.bf16.mxu0 0
      %319 = vmatpush1.bf16.msra.mxu0 0
      %320 = vmatprep.mubr.bf16.mxu0 0
      %321 = vmatmul.mubr.bf16.gmra.mrb[0].mxu0 %v283
      %v322 = vpop.f32.mrb[0].mxu0
      %v323 = vadd.f32 0.0, %v322
      %v324 = vpop.f32.mrb[0].mxu0
      %v325 = vpop.f32.mrb[0].mxu0
      %v326 = vpop.f32.mrb[0].mxu0
      %327 = vdwg.mxu0
      %v328 = vadd.f32 %v265, %v323
      %s329 = scalar_lea.vmem %s164, 4
      %v330 = vld [vmem:[%s329] sm:$0x3]
      %s331 = scalar_lea.vmem %s1, 12
      %v332 = vld [vmem:[%s331] sm:$0xf]
      %v334 = vsel %vm176, %v332, 0
      %v337 = vsel %vm180, %v330, 0
      %339 = vmatprep.subr.bf16.mxu0 0
      %340 = vmatpush1.bf16.msra.mxu0 %v337
      %341 = vmatprep.subr.bf16.mxu0 0
      %342 = vmatpush1.bf16.msra.mxu0 0
      %343 = vmatprep.subr.bf16.mxu0 0
      %344 = vmatpush1.bf16.msra.mxu0 0
      %345 = vmatprep.subr.bf16.mxu0 0
      %346 = vmatpush1.bf16.msra.mxu0 0
      %347 = vmatprep.subr.bf16.mxu0 0
      %348 = vmatpush1.bf16.msra.mxu0 0
      %349 = vmatprep.subr.bf16.mxu0 0
      %350 = vmatpush1.bf16.msra.mxu0 0
      %351 = vmatprep.subr.bf16.mxu0 0
      %352 = vmatpush1.bf16.msra.mxu0 0
      %353 = vmatprep.subr.bf16.mxu0 0
      %354 = vmatpush1.bf16.msra.mxu0 0
      %355 = vmatprep.subr.bf16.mxu0 0
      %356 = vmatpush1.bf16.msra.mxu0 0
      %357 = vmatprep.subr.bf16.mxu0 0
      %358 = vmatpush1.bf16.msra.mxu0 0
      %359 = vmatprep.subr.bf16.mxu0 0
      %360 = vmatpush1.bf16.msra.mxu0 0
      %361 = vmatprep.subr.bf16.mxu0 0
      %362 = vmatpush1.bf16.msra.mxu0 0
      %363 = vmatprep.subr.bf16.mxu0 0
      %364 = vmatpush1.bf16.msra.mxu0 0
      %365 = vmatprep.subr.bf16.mxu0 0
      %366 = vmatpush1.bf16.msra.mxu0 0
      %367 = vmatprep.subr.bf16.mxu0 0
      %368 = vmatpush1.bf16.msra.mxu0 0
      %369 = vmatprep.subr.bf16.mxu0 0
      %370 = vmatpush1.bf16.msra.mxu0 0
      %371 = vmatprep.mubr.bf16.mxu0 0
      %372 = vmatmul.mubr.bf16.gmra.mrb[0].mxu0 %v334
      %v373 = vpop.f32.mrb[0].mxu0
      %v374 = vadd.f32 0.0, %v373
      %v375 = vpop.f32.mrb[0].mxu0
      %v376 = vpop.f32.mrb[0].mxu0
      %v377 = vpop.f32.mrb[0].mxu0
      %378 = vdwg.mxu0
      %v379 = vadd.f32 %v328, %v374
      %s380 = scalar_lea.vmem %s164, 6
      %v381 = vld [vmem:[%s380] sm:$0x3]
      %s382 = scalar_lea.vmem %s1, 16
      %v383 = vld [vmem:[%s382] sm:$0xf]
      %v385 = vsel %vm176, %v383, 0
      %v388 = vsel %vm180, %v381, 0
      %390 = vmatprep.subr.bf16.mxu0 0
      %391 = vmatpush1.bf16.msra.mxu0 %v388
      %392 = vmatprep.subr.bf16.mxu0 0
      %393 = vmatpush1.bf16.msra.mxu0 0
      %394 = vmatprep.subr.bf16.mxu0 0
      %395 = vmatpush1.bf16.msra.mxu0 0
      %396 = vmatprep.subr.bf16.mxu0 0
      %397 = vmatpush1.bf16.msra.mxu0 0
      %398 = vmatprep.subr.bf16.mxu0 0
      %399 = vmatpush1.bf16.msra.mxu0 0
      %400 = vmatprep.subr.bf16.mxu0 0
      %401 = vmatpush1.bf16.msra.mxu0 0
      %402 = vmatprep.subr.bf16.mxu0 0
      %403 = vmatpush1.bf16.msra.mxu0 0
      %404 = vmatprep.subr.bf16.mxu0 0
      %405 = vmatpush1.bf16.msra.mxu0 0
      %406 = vmatprep.subr.bf16.mxu0 0
      %407 = vmatpush1.bf16.msra.mxu0 0
      %408 = vmatprep.subr.bf16.mxu0 0
      %409 = vmatpush1.bf16.msra.mxu0 0
      %410 = vmatprep.subr.bf16.mxu0 0
      %411 = vmatpush1.bf16.msra.mxu0 0
      %412 = vmatprep.subr.bf16.mxu0 0
      %413 = vmatpush1.bf16.msra.mxu0 0
      %414 = vmatprep.subr.bf16.mxu0 0
      %415 = vmatpush1.bf16.msra.mxu0 0
      %416 = vmatprep.subr.bf16.mxu0 0
      %417 = vmatpush1.bf16.msra.mxu0 0
      %418 = vmatprep.subr.bf16.mxu0 0
      %419 = vmatpush1.bf16.msra.mxu0 0
      %420 = vmatprep.subr.bf16.mxu0 0
      %421 = vmatpush1.bf16.msra.mxu0 0
      %422 = vmatprep.mubr.bf16.mxu0 0
      %423 = vmatmul.mubr.bf16.gmra.mrb[0].mxu0 %v385
      %v424 = vpop.f32.mrb[0].mxu0
      %v425 = vadd.f32 0.0, %v424
      %v426 = vpop.f32.mrb[0].mxu0
      %v427 = vpop.f32.mrb[0].mxu0
      %v428 = vpop.f32.mrb[0].mxu0
      %429 = vdwg.mxu0
      %v430 = vadd.f32 %v379, %v425
      %s431 = scalar_lea.vmem %s1, 20
      %v432 = vld [vmem:[%s431] sm:$0xf]
      %v435 = vunpack.c.l.s4 1983009808
      %v436 = vunpack.c.0.s8 %v435
      %v437 = vlaneseq
      %v438 = vshrl.u32 %v437, 7
      %v439 = vsub.s32 %v436, %v438
      %v440 = vrot.slane %v330, %v439
      %441 = vrot.lane.b32.xlu0 %v440, 127
      %v442 = vpop.permute.xlu0 %441
      %v444 = vsel %vm176, %v432, 0
      %v447 = vsel %vm180, %v442, 0
      %449 = vmatprep.subr.bf16.mxu0 0
      %450 = vmatpush1.bf16.msra.mxu0 %v447
      %451 = vmatprep.subr.bf16.mxu0 0
      %452 = vmatpush1.bf16.msra.mxu0 0
      %453 = vmatprep.subr.bf16.mxu0 0
      %454 = vmatpush1.bf16.msra.mxu0 0
      %455 = vmatprep.subr.bf16.mxu0 0
      %456 = vmatpush1.bf16.msra.mxu0 0
      %457 = vmatprep.subr.bf16.mxu0 0
      %458 = vmatpush1.bf16.msra.mxu0 0
      %459 = vmatprep.subr.bf16.mxu0 0
      %460 = vmatpush1.bf16.msra.mxu0 0
      %461 = vmatprep.subr.bf16.mxu0 0
      %462 = vmatpush1.bf16.msra.mxu0 0
      %463 = vmatprep.subr.bf16.mxu0 0
      %464 = vmatpush1.bf16.msra.mxu0 0
      %465 = vmatprep.subr.bf16.mxu0 0
      %466 = vmatpush1.bf16.msra.mxu0 0
      %467 = vmatprep.subr.bf16.mxu0 0
      %468 = vmatpush1.bf16.msra.mxu0 0
      %469 = vmatprep.subr.bf16.mxu0 0
      %470 = vmatpush1.bf16.msra.mxu0 0
      %471 = vmatprep.subr.bf16.mxu0 0
      %472 = vmatpush1.bf16.msra.mxu0 0
      %473 = vmatprep.subr.bf16.mxu0 0
      %474 = vmatpush1.bf16.msra.mxu0 0
      %475 = vmatprep.subr.bf16.mxu0 0
      %476 = vmatpush1.bf16.msra.mxu0 0
      %477 = vmatprep.subr.bf16.mxu0 0
      %478 = vmatpush1.bf16.msra.mxu0 0
      %479 = vmatprep.subr.bf16.mxu0 0
      %480 = vmatpush1.bf16.msra.mxu0 0
      %481 = vmatprep.mubr.bf16.mxu0 0
      %482 = vmatmul.mubr.bf16.gmra.mrb[0].mxu0 %v444
      %v483 = vpop.f32.mrb[0].mxu0
      %v484 = vadd.f32 0.0, %v483
      %v485 = vpop.f32.mrb[0].mxu0
      %v486 = vpop.f32.mrb[0].mxu0
      %v487 = vpop.f32.mrb[0].mxu0
      %488 = vdwg.mxu0
      %v489 = vadd.f32 %v430, %v484
      %v490 = vld [vmem:[%s164] sm:$0x3]
      %s491 = scalar_lea.vmem %s1, 24
      %v492 = vld [vmem:[%s491] sm:$0xf]
      %v495 = vunpack.c.l.s4 1983009808
      %v496 = vunpack.c.0.s8 %v495
      %v497 = vlaneseq
      %v498 = vshrl.u32 %v497, 7
      %v499 = vsub.s32 %v496, %v498
      %v500 = vrot.slane %v490, %v499
      %501 = vrot.lane.b32.xlu0 %v500, 119
      %v502 = vpop.permute.xlu0 %501
      %v504 = vsel %vm176, %v492, 0
      %v507 = vsel %vm180, %v502, 0
      %509 = vmatprep.subr.bf16.mxu0 0
      %510 = vmatpush1.bf16.msra.mxu0 %v507
      %511 = vmatprep.subr.bf16.mxu0 0
      %512 = vmatpush1.bf16.msra.mxu0 0
      %513 = vmatprep.subr.bf16.mxu0 0
      %514 = vmatpush1.bf16.msra.mxu0 0
      %515 = vmatprep.subr.bf16.mxu0 0
      %516 = vmatpush1.bf16.msra.mxu0 0
      %517 = vmatprep.subr.bf16.mxu0 0
      %518 = vmatpush1.bf16.msra.mxu0 0
      %519 = vmatprep.subr.bf16.mxu0 0
      %520 = vmatpush1.bf16.msra.mxu0 0
      %521 = vmatprep.subr.bf16.mxu0 0
      %522 = vmatpush1.bf16.msra.mxu0 0
      %523 = vmatprep.subr.bf16.mxu0 0
      %524 = vmatpush1.bf16.msra.mxu0 0
      %525 = vmatprep.subr.bf16.mxu0 0
      %526 = vmatpush1.bf16.msra.mxu0 0
      %527 = vmatprep.subr.bf16.mxu0 0
      %528 = vmatpush1.bf16.msra.mxu0 0
      %529 = vmatprep.subr.bf16.mxu0 0
      %530 = vmatpush1.bf16.msra.mxu0 0
      %531 = vmatprep.subr.bf16.mxu0 0
      %532 = vmatpush1.bf16.msra.mxu0 0
      %533 = vmatprep.subr.bf16.mxu0 0
      %534 = vmatpush1.bf16.msra.mxu0 0
      %535 = vmatprep.subr.bf16.mxu0 0
      %536 = vmatpush1.bf16.msra.mxu0 0
      %537 = vmatprep.subr.bf16.mxu0 0
      %538 = vmatpush1.bf16.msra.mxu0 0
      %539 = vmatprep.subr.bf16.mxu0 0
      %540 = vmatpush1.bf16.msra.mxu0 0
      %541 = vmatprep.mubr.bf16.mxu0 0
      %542 = vmatmul.mubr.bf16.gmra.mrb[0].mxu0 %v504
      %v543 = vpop.f32.mrb[0].mxu0
      %v544 = vadd.f32 0.0, %v543
      %v545 = vpop.f32.mrb[0].mxu0
      %v546 = vpop.f32.mrb[0].mxu0
      %v547 = vpop.f32.mrb[0].mxu0
      %548 = vdwg.mxu0
      %v549 = vadd.f32 %v489, %v544
      %v550 = vld [vmem:[%s172] sm:$0x3]
      %s551 = scalar_lea.vmem %s1, 28
      %v552 = vld [vmem:[%s551] sm:$0xf]
      %v555 = vunpack.c.l.s4 1983009808
      %v556 = vunpack.c.0.s8 %v555
      %v557 = vlaneseq
      %v558 = vshrl.u32 %v557, 7
      %v559 = vsub.s32 %v556, %v558
      %v560 = vrot.slane %v550, %v559
      %561 = vrot.lane.b32.xlu0 %v560, 119
      %v562 = vpop.permute.xlu0 %561
      %v564 = vsel %vm176, %v552, 0
      %v567 = vsel %vm180, %v562, 0
      %569 = vmatprep.subr.bf16.mxu0 0
      %570 = vmatpush1.bf16.msra.mxu0 %v567
      %571 = vmatprep.subr.bf16.mxu0 0
      %572 = vmatpush1.bf16.msra.mxu0 0
      %573 = vmatprep.subr.bf16.mxu0 0
      %574 = vmatpush1.bf16.msra.mxu0 0
      %575 = vmatprep.subr.bf16.mxu0 0
      %576 = vmatpush1.bf16.msra.mxu0 0
      %577 = vmatprep.subr.bf16.mxu0 0
      %578 = vmatpush1.bf16.msra.mxu0 0
      %579 = vmatprep.subr.bf16.mxu0 0
      %580 = vmatpush1.bf16.msra.mxu0 0
      %581 = vmatprep.subr.bf16.mxu0 0
      %582 = vmatpush1.bf16.msra.mxu0 0
      %583 = vmatprep.subr.bf16.mxu0 0
      %584 = vmatpush1.bf16.msra.mxu0 0
      %585 = vmatprep.subr.bf16.mxu0 0
      %586 = vmatpush1.bf16.msra.mxu0 0
      %587 = vmatprep.subr.bf16.mxu0 0
      %588 = vmatpush1.bf16.msra.mxu0 0
      %589 = vmatprep.subr.bf16.mxu0 0
      %590 = vmatpush1.bf16.msra.mxu0 0
      %591 = vmatprep.subr.bf16.mxu0 0
      %592 = vmatpush1.bf16.msra.mxu0 0
      %593 = vmatprep.subr.bf16.mxu0 0
      %594 = vmatpush1.bf16.msra.mxu0 0
      %595 = vmatprep.subr.bf16.mxu0 0
      %596 = vmatpush1.bf16.msra.mxu0 0
      %597 = vmatprep.subr.bf16.mxu0 0
      %598 = vmatpush1.bf16.msra.mxu0 0
      %599 = vmatprep.subr.bf16.mxu0 0
      %600 = vmatpush1.bf16.msra.mxu0 0
      %601 = vmatprep.mubr.bf16.mxu0 0
      %602 = vmatmul.mubr.bf16.gmra.mrb[0].mxu0 %v564
      %v603 = vpop.f32.mrb[0].mxu0
      %v604 = vadd.f32 0.0, %v603
      %v605 = vpop.f32.mrb[0].mxu0
      %v606 = vpop.f32.mrb[0].mxu0
      %v607 = vpop.f32.mrb[0].mxu0
      %608 = vdwg.mxu0
      %v609 = vadd.f32 %v549, %v604
      %v610 = vld [vmem:[%s164] sm:$0x3]
      %s611 = scalar_lea.vmem %s1, 32
      %v612 = vld [vmem:[%s611] sm:$0xf]
      %v615 = vunpack.c.l.s4 1983009808
      %v616 = vunpack.c.0.s8 %v615
      %v617 = vlaneseq
      %v618 = vshrl.u32 %v617, 7
      %v619 = vsub.s32 %v616, %v618
      %v620 = vrot.slane %v610, %v619
      %621 = vrot.lane.b32.xlu0 %v620, 118
      %v622 = vpop.permute.xlu0 %621
      %v624 = vsel %vm176, %v612, 0
      %v627 = vsel %vm180, %v622, 0
      %629 = vmatprep.subr.bf16.mxu0 0
      %630 = vmatpush1.bf16.msra.mxu0 %v627
      %631 = vmatprep.subr.bf16.mxu0 0
      %632 = vmatpush1.bf16.msra.mxu0 0
      %633 = vmatprep.subr.bf16.mxu0 0
      %634 = vmatpush1.bf16.msra.mxu0 0
      %635 = vmatprep.subr.bf16.mxu0 0
      %636 = vmatpush1.bf16.msra.mxu0 0
      %637 = vmatprep.subr.bf16.mxu0 0
      %638 = vmatpush1.bf16.msra.mxu0 0
      %639 = vmatprep.subr.bf16.mxu0 0
      %640 = vmatpush1.bf16.msra.mxu0 0
      %641 = vmatprep.subr.bf16.mxu0 0
      %642 = vmatpush1.bf16.msra.mxu0 0
      %643 = vmatprep.subr.bf16.mxu0 0
      %644 = vmatpush1.bf16.msra.mxu0 0
      %645 = vmatprep.subr.bf16.mxu0 0
      %646 = vmatpush1.bf16.msra.mxu0 0
      %647 = vmatprep.subr.bf16.mxu0 0
      %648 = vmatpush1.bf16.msra.mxu0 0
      %649 = vmatprep.subr.bf16.mxu0 0
      %650 = vmatpush1.bf16.msra.mxu0 0
      %651 = vmatprep.subr.bf16.mxu0 0
      %652 = vmatpush1.bf16.msra.mxu0 0
      %653 = vmatprep.subr.bf16.mxu0 0
      %654 = vmatpush1.bf16.msra.mxu0 0
      %655 = vmatprep.subr.bf16.mxu0 0
      %656 = vmatpush1.bf16.msra.mxu0 0
      %657 = vmatprep.subr.bf16.mxu0 0
      %658 = vmatpush1.bf16.msra.mxu0 0
      %659 = vmatprep.subr.bf16.mxu0 0
      %660 = vmatpush1.bf16.msra.mxu0 0
      %661 = vmatprep.mubr.bf16.mxu0 0
      %662 = vmatmul.mubr.bf16.gmra.mrb[0].mxu0 %v624
      %v663 = vpop.f32.mrb[0].mxu0
      %v664 = vadd.f32 0.0, %v663
      %v665 = vpop.f32.mrb[0].mxu0
      %v666 = vpop.f32.mrb[0].mxu0
      %v667 = vpop.f32.mrb[0].mxu0
      %668 = vdwg.mxu0
      %v669 = vadd.f32 %v609, %v664
      %v670 = vld [vmem:[%s2] sm:$0xff]
      %672 = vset.pattern.permute.xlu0 0
      %673 = vperm.xlu0 %672, %v670
      %v674 = vpop.permute.xlu0 %673
      %v676 = vadd.f32 %v669, %v674
      %vm677 = vcmask 588800
      %678 = vst.msk [vmem:[%s168] sm:$0xff] %vm677, %v676
      %p679 = scmp.lt.s32.totalorder %s14, 1
      %s680 = scalar_select %p679, %s14, 1
      %s681 = smul.addr %s680, 8
      %s682 = scalar_lea.vmem %s3, %s681
      // Predicated region
      $region33: #{_lambda_.1} parent=31 // pred_check
        %p683 = pneg %p100
      $region34: #{_lambda_.1} parent=31 // pred_check_branch
        %685 = sbr.rel (%p683) target = $region36
      $region35: #{_lambda_.1} parent=31 // pred_region
        _
      $region36: #{_lambda_.1} parent=31 // pred_fallthru
        _
    $region32: #{_lambda_.1} parent=5 // pred_fallthru
      _
    %p686 = scmp.le.s32.totalorder 2, %s9
    // Predicated region
    $region37: #{_lambda_.1} parent=5 // pred_check
      %p687 = pneg %p686
    $region38: #{_lambda_.1} parent=5 // pred_check_branch
      %689 = sbr.rel (%p687) target = $region40
    $region39: #{_lambda_.1} parent=5 // pred_region
      %s690 = ssub.s32 %s9, 2
      // Predicated region
      $region41: #{_lambda_.1} parent=39 // pred_check
        %p691 = pneg %p106
      $region42: #{_lambda_.1} parent=39 // pred_check_branch
        %693 = sbr.rel (%p691) target = $region44
      $region43: #{_lambda_.1} parent=39 // pred_region
        %p694 = scmp.lt.s32.totalorder %s15, 1
        %s695 = scalar_select %p694, %s15, 1
        %s696 = smul.addr %s695, 8
        %s697 = scalar_lea.vmem %s3, %s696
      $region44: #{_lambda_.1} parent=39 // pred_fallthru
        _
    $region40: #{_lambda_.1} parent=5 // pred_fallthru
      _
  $region6: #{_lambda_.1} parent=0 // loop_footer
    %s13 = sadd.s32 1, %s9
  $region7: #{_lambda_.1} parent=0 // loop_footer_branch
    %8 = sbr.rel target = $region3
  $region8: #{_lambda_.1} parent=0 // loop_exit
    _

</llo_original>
